<compile_context>
chip_gen: v7x
topology: tpu7x:2x2x1
jax: 0.10.0
libtpu: 0.0.40
codegen_flags: <defaults>
</compile_context>

<pallas_src>
import jax
import jax.numpy as jnp
from jax import lax
from jax.experimental import pallas as pl
from jax.experimental.pallas import tpu as pltpu


def _round_up(x, m):
    return ((x + m - 1) // m) * m


def _tpu_vmem_and_cores():
    """Per-TensorCore VMEM capacity and a TensorCore-count heuristic."""
    vmem = 64 * 1024 * 1024  # conservative default == v7x per-TC VMEM
    try:
        info = pltpu.get_tpu_info()
        vmem = int(getattr(info, "vmem_capacity_bytes", vmem))
    except Exception:
        pass
    # v7x (64 MiB per-TC VMEM) has 2 TensorCores sharing the chip.
    cores = 2 if vmem <= 64 * 1024 * 1024 else 1
    return vmem, cores


def _vmem_estimate(tile, d_pad, tn, n_row_in, n_row_out, io_bytes, w_bytes):
    """Approximate VMEM use of one grid step, including f32 temporaries."""
    row_in = 2 * n_row_in * tile * d_pad * io_bytes       # double-buffered input tiles
    out_buf = 2 * tile * tn * io_bytes                    # mixer-output tile
    res_buf = 2 * n_row_out * tile * d_pad * io_bytes     # new-residual tile (0 or 1)
    weight = 2 * d_pad * tn * w_bytes                     # weight block (double-buffered)
    vecs = 2 * (2 * d_pad + tn) * 4                       # gamma/beta/bias (f32)
    h_cache = tile * d_pad * w_bytes                      # LN output cached across columns
    f32_tmp = 3 * tile * d_pad * 4 + tile * tn * 4        # xf/xc/h + matmul accumulator
    return row_in + out_buf + res_buf + weight + vecs + h_cache + f32_tmp


def _pick_col_tile(d_pad, w_elem_bytes, w_budget):
    """Output-feature tile of the mixer weight (multiple of 128, divides d_pad)."""
    if d_pad * d_pad * w_elem_bytes <= w_budget:
        return d_pad                                       # whole weight stays resident
    for tn in (2048, 1024, 512, 256):
        if d_pad % tn == 0 and d_pad * tn * w_elem_bytes <= w_budget:
            return tn
    for tn in (256, 512, 1024, 2048):                      # smallest dividing block
        if d_pad % tn == 0:
            return tn
    return d_pad


def _pick_tile(n_rows, fits, min_steps):
    """Largest MXU-aligned row tile that fits the VMEM budget.

    Prefers tiles that divide n_rows (no wrapper-side row padding) and give at
    least `min_steps` grid steps along the row axis (>= 2 per TensorCore).
    """
    candidates = (512, 256, 128)
    n8 = _round_up(n_rows, 8)
    if n8 <= candidates[0]:
        # Few rows: try to split into equal MXU-aligned tiles for pipelining,
        # otherwise a single tile covering every row (no padding).
        for t in candidates:
            if t < n8 and n_rows % t == 0 and (n_rows // t) >= min_steps and fits(t):
                return t
        return n8
    fitting = [t for t in candidates if fits(t)]
    if not fitting:
        # TODO(synk): last resort; the right fix at this point is more column
        # tiling of the weight, not sub-128 row tiles.
        return candidates[-1]

    def nsteps(t):
        return -(-n_rows // t)

    for t in fitting:                                      # divides N and enough steps
        if n_rows % t == 0 and nsteps(t) >= min_steps:
            return t
    for t in fitting:                                      # enough steps
        if nsteps(t) >= min_steps:
            return t
    for t in fitting:                                      # at least divides N
        if n_rows % t == 0:
            return t
    return fitting[0]


def _make_block_kernel(d_actual, d_pad, has_residual, eps):
    """Fused Add -> LayerNorm -> Linear-mixer kernel (2-D grid: rows x columns)."""
    need_mask = d_actual != d_pad
    inv_d = 1.0 / float(d_actual)

    def kernel(*refs):
        if has_residual:
            (hid_ref, res_ref, gamma_ref, beta_ref, w_ref, b_ref,
             out_ref, new_res_ref, h_scratch) = refs
        else:
            (hid_ref, gamma_ref, beta_ref, w_ref, b_ref,
             out_ref, h_scratch) = refs

        j = pl.program_id(1)

        # Add + LayerNorm once per row tile (j == 0); result cached in VMEM and
        # reused across all weight-column blocks.
        @pl.when(j == 0)
        def _():
            if has_residual:
                x = res_ref[...] + hid_ref[...]
                new_res_ref[...] = x.astype(new_res_ref.dtype)
            else:
                x = hid_ref[...]

            xf = x.astype(jnp.float32)
            if need_mask:
                mask = lax.broadcasted_iota(jnp.int32, xf.shape, 1) < d_actual
                xm = jnp.where(mask, xf, 0.0)
                mean = jnp.sum(xm, axis=-1, keepdims=True) * inv_d
                xc = jnp.where(mask, xf - mean, 0.0)
            else:
                mean = jnp.mean(xf, axis=-1, keepdims=True)
                xc = xf - mean
            var = jnp.sum(xc * xc, axis=-1, keepdims=True) * inv_d
            inv = lax.rsqrt(var + eps)
            h = xc * inv * gamma_ref[...] + beta_ref[...]   # gamma/beta pre-cast f32
            h_scratch[...] = h.astype(h_scratch.dtype)      # bf16 by default

        # Mixer matmul on the MXU: bf16 x bf16 -> f32 accumulation.
        out = jnp.dot(h_scratch[...], w_ref[...],
                      preferred_element_type=jnp.float32)
        out = out + b_ref[...]
        out_ref[...] = out.astype(out_ref.dtype)

    return kernel


def block_forward(hidden, residual, gamma, beta, w, b, *,
                  tile=None, col_tile=None, mixer_dtype=jnp.bfloat16, eps=1e-5):
    """hidden, residual: (B, L, D). Returns (mixer_out, new_residual)."""
    B, L, D = hidden.shape
    N = B * L
    out_dtype = hidden.dtype
    has_residual = residual is not None

    # Lane-dense hidden dim (multiple of 128); LN stats masked to true D.
    D_pad = _round_up(D, 128)

    # bf16 mixer weight by default (MXU-native on all generations).
    if mixer_dtype is not None:
        w = w.astype(mixer_dtype)
    w_dtype = w.dtype

    io_bytes = jnp.dtype(out_dtype).itemsize
    w_elem_bytes = jnp.dtype(w_dtype).itemsize

    vmem_cap, num_cores = _tpu_vmem_and_cores()
    budget = int(0.45 * vmem_cap)           # generation-aware VMEM budget

    # Weight column tile (output features).
    if col_tile is None:
        col_tile = _pick_col_tile(D_pad, w_elem_bytes, budget // 4)
    TN = int(col_tile)
    assert D_pad % TN == 0 and TN % 128 == 0
    n_j = D_pad // TN

    n_row_in = 2 if has_residual else 1
    n_row_out = 1 if has_residual else 0    # first block: no redundant residual write

    def fits(t):
        return _vmem_estimate(t, D_pad, TN, n_row_in, n_row_out,
                              io_bytes, w_elem_bytes) <= budget

    if tile is None:
        tile = _pick_tile(N, fits, min_steps=2 * num_cores)
    tile = max(8, _round_up(int(tile), 8))
    N_pad = _round_up(N, tile)
    n_i = N_pad // tile
    grid = (n_i, n_j)

    # ---- operand prep (no-ops when shapes already match: no extra HBM passes)
    def prep_rows(x3):
        x2 = x3.reshape(N, D)
        if N_pad == N and D_pad == D:
            return x2
        # TODO(synk): a ragged row tail could use an in-kernel masked store
        #             instead of a padded copy; padding is the rare fallback.
        return jnp.pad(x2, ((0, N_pad - N), (0, D_pad - D)))

    def prep_vec(v):
        v = v.astype(jnp.float32)
        if D_pad != D:
            v = jnp.pad(v, (0, D_pad - D))
        return v.reshape(1, D_pad)

    inputs = [prep_rows(hidden)]
    in_specs = [pl.BlockSpec((tile, D_pad), lambda i, j: (i, 0))]
    if has_residual:
        inputs.append(prep_rows(residual))
        in_specs.append(pl.BlockSpec((tile, D_pad), lambda i, j: (i, 0)))

    gamma_f = prep_vec(gamma)
    beta_f = prep_vec(beta)
    bias_f = prep_vec(b)
    w_p = w if D_pad == D else jnp.pad(w, ((0, D_pad - D), (0, D_pad - D)))

    vec_spec = pl.BlockSpec((1, D_pad), lambda i, j: (0, 0))
    w_spec = pl.BlockSpec((D_pad, TN), lambda i, j: (0, j))
    bias_spec = pl.BlockSpec((1, TN), lambda i, j: (0, j))
    inputs += [gamma_f, beta_f, w_p, bias_f]
    in_specs += [vec_spec, vec_spec, w_spec, bias_spec]

    out_spec = pl.BlockSpec((tile, TN), lambda i, j: (i, j))
    res_spec = pl.BlockSpec((tile, D_pad), lambda i, j: (i, 0))

    if has_residual:
        out_shape = (jax.ShapeDtypeStruct((N_pad, D_pad), out_dtype),
                     jax.ShapeDtypeStruct((N_pad, D_pad), out_dtype))
        out_specs = [out_spec, res_spec]
    else:
        out_shape = jax.ShapeDtypeStruct((N_pad, D_pad), out_dtype)
        out_specs = out_spec

    est = _vmem_estimate(tile, D_pad, TN, n_row_in, n_row_out,
                         io_bytes, w_elem_bytes)
    vmem_limit = int(min(0.7 * vmem_cap, max(32 * 1024 * 1024, 1.5 * est)))

    kernel = _make_block_kernel(D, D_pad, has_residual, eps)

    result = pl.pallas_call(
        kernel,
        out_shape=out_shape,
        grid_spec=pltpu.PrefetchScalarGridSpec(
            num_scalar_prefetch=0,
            grid=grid,
            in_specs=in_specs,
            out_specs=out_specs,
            scratch_shapes=[pltpu.VMEM((tile, D_pad), w_dtype)],  # LN(h) cache
        ),
        compiler_params=pltpu.CompilerParams(
            dimension_semantics=("parallel", "arbitrary"),
            vmem_limit_bytes=vmem_limit),
    )(*inputs)

    if has_residual:
        out, new_res = result
    else:
        out, new_res = result, None

    if N_pad != N or D_pad != D:
        out = out[:N, :D]
        if new_res is not None:
            new_res = new_res[:N, :D]
    out = out.reshape(B, L, D)
    if has_residual:
        new_res = new_res.reshape(B, L, D)
    else:
        new_res = hidden    # Add with residual=None is the identity: reuse input.
    return out, new_res


def _reference(hidden, residual, gamma, beta, w, b, mixer_dtype=jnp.bfloat16):
    """Pure-JAX reference of the same forward (for correctness check)."""
    res = hidden if residual is None else residual + hidden
    xf = res.astype(jnp.float32)
    mean = jnp.mean(xf, axis=-1, keepdims=True)
    xc = xf - mean
    var = jnp.mean(xc * xc, axis=-1, keepdims=True)
    h = xc * lax.rsqrt(var + 1e-5) * gamma + beta
    md = mixer_dtype if mixer_dtype is not None else w.dtype
    out = jnp.dot(h.astype(md), w.astype(md),
                  preferred_element_type=jnp.float32) + b
    return out.astype(hidden.dtype), res


if __name__ == "__main__":
    # Small shapes consistent with the module: batch=2, seq=8, hidden=32.
    B, L, D = 2, 8, 32
    key = jax.random.PRNGKey(0)
    k_h, k_r, k_g, k_b, k_w, k_bb = jax.random.split(key, 6)

    hidden = jax.random.normal(k_h, (B, L, D), dtype=jnp.float32)
    residual = jax.random.normal(k_r, (B, L, D), dtype=jnp.float32)
    gamma = 1.0 + 0.1 * jax.random.normal(k_g, (D,), dtype=jnp.float32)
    beta = 0.1 * jax.random.normal(k_b, (D,), dtype=jnp.float32)
    w_mix = (jax.random.normal(k_w, (D, D), dtype=jnp.float32)
             / jnp.sqrt(jnp.float32(D)))
    b_mix = 0.1 * jax.random.normal(k_bb, (D,), dtype=jnp.float32)

    # residual provided (bf16 mixer by default; residual path stays exact f32).
    out, new_res = block_forward(hidden, residual, gamma, beta, w_mix, b_mix)
    out = jax.block_until_ready(out)
    new_res = jax.block_until_ready(new_res)
    ref_out, ref_res = _reference(hidden, residual, gamma, beta, w_mix, b_mix)
    assert jnp.allclose(out, ref_out, atol=2e-2, rtol=2e-2)
    assert jnp.allclose(new_res, ref_res, atol=1e-5, rtol=1e-5)

    # residual=None path (first block): single-output kernel, residual is the
    # input itself (no HBM write for it).
    out0, new_res0 = block_forward(hidden, None, gamma, beta, w_mix, b_mix)
    out0 = jax.block_until_ready(out0)
    ref_out0, ref_res0 = _reference(hidden, None, gamma, beta, w_mix, b_mix)
    assert new_res0 is hidden
    assert jnp.allclose(out0, ref_out0, atol=2e-2, rtol=2e-2)
    assert jnp.allclose(new_res0, ref_res0)

    # Larger lane-dense sanity check exercising the big-row-tile path
    # (D % 128 == 0 -> no padding, tile 256/512 depending on generation).
    B2, L2, D2 = 2, 512, 256
    kh2, kr2, kw2 = jax.random.split(jax.random.PRNGKey(1), 3)
    hidden2 = jax.random.normal(kh2, (B2, L2, D2), dtype=jnp.float32)
    residual2 = jax.random.normal(kr2, (B2, L2, D2), dtype=jnp.float32)
    g2 = jnp.ones((D2,), jnp.float32)
    be2 = jnp.zeros((D2,), jnp.float32)
    w2 = (jax.random.normal(kw2, (D2, D2), dtype=jnp.float32)
          / jnp.sqrt(jnp.float32(D2)))
    bb2 = jnp.zeros((D2,), jnp.float32)
    out2, res2 = block_forward(hidden2, residual2, g2, be2, w2, bb2)
    out2 = jax.block_until_ready(out2)
    ref_out2, ref_res2 = _reference(hidden2, residual2, g2, be2, w2, bb2)
    assert jnp.allclose(out2, ref_out2, atol=2e-2, rtol=2e-2)
    assert jnp.allclose(res2, ref_res2, atol=1e-5, rtol=1e-5)

    # Column-tiled weight path (as used for large D on v7x): force TN < D so the
    # h-cache / pl.when(j == 0) reuse and resident residual output are exercised.
    B3, L3, D3 = 2, 256, 512
    kh3, kr3, kw3 = jax.random.split(jax.random.PRNGKey(2), 3)
    hidden3 = jax.random.normal(kh3, (B3, L3, D3), dtype=jnp.float32)
    residual3 = jax.random.normal(kr3, (B3, L3, D3), dtype=jnp.float32)
    g3 = 1.0 + 0.05 * jax.random.normal(jax.random.PRNGKey(3), (D3,), jnp.float32)
    be3 = jnp.zeros((D3,), jnp.float32)
    w3 = (jax.random.normal(kw3, (D3, D3), dtype=jnp.float32)
          / jnp.sqrt(jnp.float32(D3)))
    bb3 = jnp.zeros((D3,), jnp.float32)
    out3, res3 = block_forward(hidden3, residual3, g3, be3, w3, bb3,
                               tile=128, col_tile=256)
    out3 = jax.block_until_ready(out3)
    ref_out3, ref_res3 = _reference(hidden3, residual3, g3, be3, w3, bb3)
    assert jnp.allclose(out3, ref_out3, atol=2e-2, rtol=2e-2)
    assert jnp.allclose(res3, ref_res3, atol=1e-5, rtol=1e-5)

    print("KERNEL_OK")
</pallas_src>

<mosaic_0001>
module attributes {stable_mosaic.version = 11 : i64} {
  func.func @kernel(%arg0: i32, %arg1: i32, %arg2: memref<16x128xf32, #tpu.memory_space<vmem>>, %arg3: memref<16x128xf32, #tpu.memory_space<vmem>>, %arg4: memref<1x128xf32, #tpu.memory_space<vmem>>, %arg5: memref<1x128xf32, #tpu.memory_space<vmem>>, %arg6: memref<128x128xbf16, #tpu.memory_space<vmem>>, %arg7: memref<1x128xf32, #tpu.memory_space<vmem>>, %arg8: memref<16x128xf32, #tpu.memory_space<vmem>>, %arg9: memref<16x128xf32, #tpu.memory_space<vmem>>, %arg10: memref<16x128xbf16, #tpu.memory_space<vmem>>) attributes {dimension_semantics = [#tpu.dimension_semantics<parallel>, #tpu.dimension_semantics<arbitrary>], iteration_bounds = array<i64: 1, 1>, scalar_prefetch = 0 : i64, scratch_operands = 1 : i64, tpu.core_type = #tpu.core_type<tc>, window_params = [{transform_indices = @transform_0, window_bounds = array<i64: 16, 128>}, {transform_indices = @transform_1, window_bounds = array<i64: 16, 128>}, {pipeline_mode = #tpu.pipeline_mode<synchronous>, transform_indices = @transform_2, window_bounds = array<i64: 1, 128>}, {pipeline_mode = #tpu.pipeline_mode<synchronous>, transform_indices = @transform_3, window_bounds = array<i64: 1, 128>}, {transform_indices = @transform_4, window_bounds = array<i64: 128, 128>}, {transform_indices = @transform_5, window_bounds = array<i64: 1, 128>}, {transform_indices = @transform_6, window_bounds = array<i64: 16, 128>}, {transform_indices = @transform_7, window_bounds = array<i64: 16, 128>}]} {
    %c0_i32 = arith.constant 0 : i32
    %0 = arith.cmpi eq, %arg1, %c0_i32 : i32
    %1 = arith.extui %0 : i1 to i32
    %c0_i32_0 = arith.constant 0 : i32
    %2 = arith.cmpi ne, %1, %c0_i32_0 : i32
    scf.if %2 {
      %c0_8 = arith.constant 0 : index
      %c0_9 = arith.constant 0 : index
      %10 = vector.load %arg3[%c0_8, %c0_9] : memref<16x128xf32, #tpu.memory_space<vmem>>, vector<16x128xf32>
      %c0_10 = arith.constant 0 : index
      %c0_11 = arith.constant 0 : index
      %11 = vector.load %arg2[%c0_10, %c0_11] : memref<16x128xf32, #tpu.memory_space<vmem>>, vector<16x128xf32>
      %12 = arith.addf %10, %11 : vector<16x128xf32>
      %c0_12 = arith.constant 0 : index
      %c0_13 = arith.constant 0 : index
      %13 = vector.load %arg9[%c0_12, %c0_13] : memref<16x128xf32, #tpu.memory_space<vmem>>, vector<16x128xf32>
      tpu.vector_store %arg9[%c0_12, %c0_13], %12 {strides = array<i32>} : memref<16x128xf32, #tpu.memory_space<vmem>>, vector<16x128xf32>,
      %14 = tpu.iota {dimensions = array<i32: 1>} : vector<16x128xi32>
      %c32_i32 = arith.constant 32 : i32
      %15 = vector.broadcast %c32_i32 : i32 to vector<16x128xi32>
      %16 = arith.cmpi slt, %14, %15 : vector<16x128xi32>
      %cst_14 = arith.constant 0.000000e+00 : f32
      %17 = vector.broadcast %cst_14 : f32 to vector<16x128xf32>
      %18 = arith.select %16, %12, %17 : vector<16x128xi1>, vector<16x128xf32>
      %cst_15 = arith.constant dense<0.000000e+00> : vector<16xf32>
      %19 = vector.multi_reduction <add>, %18, %cst_15 [1] : vector<16x128xf32> to vector<16xf32>
      %20 = vector.shape_cast %19 : vector<16xf32> to vector<16x1xf32>
      %cst_16 = arith.constant 3.125000e-02 : f32
      %21 = vector.broadcast %cst_16 : f32 to vector<16x1xf32>
      %22 = arith.mulf %20, %21 : vector<16x1xf32>
      %23 = vector.broadcast %22 : vector<16x1xf32> to vector<16x128xf32>
      %24 = arith.subf %12, %23 : vector<16x128xf32>
      %cst_17 = arith.constant 0.000000e+00 : f32
      %25 = vector.broadcast %cst_17 : f32 to vector<16x128xf32>
      %26 = arith.select %16, %24, %25 : vector<16x128xi1>, vector<16x128xf32>
      %27 = arith.mulf %26, %26 : vector<16x128xf32>
      %cst_18 = arith.constant dense<0.000000e+00> : vector<16xf32>
      %28 = vector.multi_reduction <add>, %27, %cst_18 [1] : vector<16x128xf32> to vector<16xf32>
      %29 = vector.shape_cast %28 : vector<16xf32> to vector<16x1xf32>
      %cst_19 = arith.constant 3.125000e-02 : f32
      %30 = vector.broadcast %cst_19 : f32 to vector<16x1xf32>
      %31 = arith.mulf %29, %30 : vector<16x1xf32>
      %cst_20 = arith.constant 9.99999974E-6 : f32
      %32 = vector.broadcast %cst_20 : f32 to vector<16x1xf32>
      %33 = arith.addf %31, %32 : vector<16x1xf32>
      %34 = math.rsqrt %33 : vector<16x1xf32>
      %35 = vector.broadcast %34 : vector<16x1xf32> to vector<16x128xf32>
      %36 = arith.mulf %26, %35 : vector<16x128xf32>
      %c0_21 = arith.constant 0 : index
      %c0_22 = arith.constant 0 : index
      %37 = vector.load %arg4[%c0_21, %c0_22] : memref<1x128xf32, #tpu.memory_space<vmem>>, vector<1x128xf32>
      %38 = vector.broadcast %37 : vector<1x128xf32> to vector<16x128xf32>
      %39 = arith.mulf %36, %38 : vector<16x128xf32>
      %c0_23 = arith.constant 0 : index
      %c0_24 = arith.constant 0 : index
      %40 = vector.load %arg5[%c0_23, %c0_24] : memref<1x128xf32, #tpu.memory_space<vmem>>, vector<1x128xf32>
      %41 = vector.broadcast %40 : vector<1x128xf32> to vector<16x128xf32>
      %42 = arith.addf %39, %41 : vector<16x128xf32>
      %43 = arith.truncf %42 : vector<16x128xf32> to vector<16x128xbf16>
      %c0_25 = arith.constant 0 : index
      %c0_26 = arith.constant 0 : index
      %44 = vector.load %arg10[%c0_25, %c0_26] : memref<16x128xbf16, #tpu.memory_space<vmem>>, vector<16x128xbf16>
      tpu.vector_store %arg10[%c0_25, %c0_26], %43 {strides = array<i32>} : memref<16x128xbf16, #tpu.memory_space<vmem>>, vector<16x128xbf16>,
    } else {
    }
    %c0 = arith.constant 0 : index
    %c0_1 = arith.constant 0 : index
    %3 = vector.load %arg10[%c0, %c0_1] : memref<16x128xbf16, #tpu.memory_space<vmem>>, vector<16x128xbf16>
    %c0_2 = arith.constant 0 : index
    %c0_3 = arith.constant 0 : index
    %4 = vector.load %arg6[%c0_2, %c0_3] : memref<128x128xbf16, #tpu.memory_space<vmem>>, vector<128x128xbf16>
    %cst = arith.constant dense<0.000000e+00> : vector<16x128xf32>
    %5 = tpu.matmul %3, %4, %cst {dimension_numbers = #tpu.dot_dimension_numbers<[1], [0], [0], [1], [0, 0, 1, 1], [], []>} : vector<16x128xbf16>, vector<128x128xbf16>, vector<16x128xf32> -> vector<16x128xf32>
    %c0_4 = arith.constant 0 : index
    %c0_5 = arith.constant 0 : index
    %6 = vector.load %arg7[%c0_4, %c0_5] : memref<1x128xf32, #tpu.memory_space<vmem>>, vector<1x128xf32>
    %7 = vector.broadcast %6 : vector<1x128xf32> to vector<16x128xf32>
    %8 = arith.addf %5, %7 : vector<16x128xf32>
    %c0_6 = arith.constant 0 : index
    %c0_7 = arith.constant 0 : index
    %9 = vector.load %arg8[%c0_6, %c0_7] : memref<16x128xf32, #tpu.memory_space<vmem>>, vector<16x128xf32>
    tpu.vector_store %arg8[%c0_6, %c0_7], %8 {strides = array<i32>} : memref<16x128xf32, #tpu.memory_space<vmem>>, vector<16x128xf32>,
    return
  }
  func.func @transform_0(%arg0: i32, %arg1: i32) -> (i32, i32) {
    %c0_i32 = arith.constant 0 : i32
    %c0_i32_0 = arith.constant 0 : i32
    return %arg0, %c0_i32 : i32, i32
  }
  func.func @transform_1(%arg0: i32, %arg1: i32) -> (i32, i32) {
    %c0_i32 = arith.constant 0 : i32
    %c0_i32_0 = arith.constant 0 : i32
    return %arg0, %c0_i32 : i32, i32
  }
  func.func @transform_2(%arg0: i32, %arg1: i32) -> (i32, i32) {
    %c0_i32 = arith.constant 0 : i32
    %c0_i32_0 = arith.constant 0 : i32
    %c0_i32_1 = arith.constant 0 : i32
    return %c0_i32, %c0_i32_0 : i32, i32
  }
  func.func @transform_3(%arg0: i32, %arg1: i32) -> (i32, i32) {
    %c0_i32 = arith.constant 0 : i32
    %c0_i32_0 = arith.constant 0 : i32
    %c0_i32_1 = arith.constant 0 : i32
    return %c0_i32, %c0_i32_0 : i32, i32
  }
  func.func @transform_4(%arg0: i32, %arg1: i32) -> (i32, i32) {
    %c0_i32 = arith.constant 0 : i32
    %c0_i32_0 = arith.constant 0 : i32
    return %c0_i32, %arg1 : i32, i32
  }
  func.func @transform_5(%arg0: i32, %arg1: i32) -> (i32, i32) {
    %c0_i32 = arith.constant 0 : i32
    %c0_i32_0 = arith.constant 0 : i32
    return %c0_i32, %arg1 : i32, i32
  }
  func.func @transform_6(%arg0: i32, %arg1: i32) -> (i32, i32) {
    %c0_i32 = arith.constant 0 : i32
    return %arg0, %arg1 : i32, i32
  }
  func.func @transform_7(%arg0: i32, %arg1: i32) -> (i32, i32) {
    %c0_i32 = arith.constant 0 : i32
    %c0_i32_0 = arith.constant 0 : i32
    return %arg0, %c0_i32 : i32, i32
  }
}

</mosaic_0001>

<llo_original>
// kernel: tpu_custom_call.1
$region0: #{tpu_custom_call.1}
  #allocation0 [shape = 'u32[]', space=smem, size = 0x4, offset = 0x4, fixed_abs, tag = 'smem constant byte address 0x4 - core index']
  #allocation1 [shape = 'u32[144,128]{1,0:T(1,128)}', space=vmem, size = 0x12000, scoped, tag = 'internal scratch']
  #allocation2 [shape = 'bf16[16,128]{1,0:T(16,128)(2,1)}', space=vmem, size = 0x1000, scoped, tag = 'scratch operand']
  %s0 = inlined_call_operand.hbm [shape: f32[16,128], index: 0, kind: input, shape index: {}]
  %s1 = inlined_call_operand.hbm [shape: f32[16,128], index: 1, kind: input, shape index: {}]
  %s2 = inlined_call_operand.vmem [shape: f32[1,128], index: 2, kind: input, shape index: {}]
  %s3 = inlined_call_operand.vmem [shape: f32[1,128], index: 3, kind: input, shape index: {}]
  %s4 = inlined_call_operand.hbm [shape: bf16[128,128], index: 4, kind: input, shape index: {}]
  %s5 = inlined_call_operand.vmem [shape: f32[1,128], index: 5, kind: input, shape index: {}]
  %s6 = inlined_call_operand.hbm [shape: f32[16,128], index: 6, kind: output, shape index: {0}]
  %s7 = inlined_call_operand.hbm [shape: f32[16,128], index: 7, kind: output, shape index: {1}]
  %8 = xla_tuple %s6, %s7
  %s9 = sld [smem:[#allocation0]]
  $region58: #{tpu_custom_call.1} parent=0
    _
  %s11 = ssub.s32 1, %s9
  %s12 = scalar_select 0, %s11, %s9
  $region1: #{tpu_custom_call.1} parent=0
    #allocation3 [shape = 'u8[8192]{0}', space=vmem, size = 0x2000, scoped, tag = 'input window, operand 0, single buffered']
    #allocation4 [shape = 's32[1]{0}', space=sflag, size = 0x4, scoped, tag = 'scoped memory for tpu_custom_call.1']
    #allocation5 [shape = 's32[1]{0}', space=sflag, size = 0x4, scoped, tag = 'scoped memory for tpu_custom_call.1']
    #allocation6 [shape = 'u8[8192]{0}', space=vmem, size = 0x2000, scoped, tag = 'input window, operand 1, single buffered']
    #allocation7 [shape = 's32[1]{0}', space=sflag, size = 0x4, scoped, tag = 'scoped memory for tpu_custom_call.1']
    #allocation8 [shape = 'u8[32768]{0}', space=vmem, size = 0x8000, scoped, tag = 'input window, operand 4, single buffered']
    #allocation9 [shape = 'u8[8192]{0}', space=vmem, size = 0x2000, scoped, tag = 'output window, operand 0, single buffered']
    #allocation10 [shape = 'u8[8192]{0}', space=vmem, size = 0x2000, scoped, tag = 'output window, operand 1, single buffered']
    #allocation11 [shape = 's32[1]{0}', space=sflag, size = 0x4, scoped, tag = 'scoped memory for tpu_custom_call.1']
    %13 = vsyncpa [#allocation4], 0
    %14 = vsyncpa [#allocation7], 0
    %15 = vsyncpa [#allocation5], 0
    %16 = vsyncpa [#allocation11], 0
    // Predicated region
    $region2: #{tpu_custom_call.1} parent=1 // pred_check
      _
    $region3: #{tpu_custom_call.1} parent=1 // pred_check_branch
      %18 = sbr.rel (0) target = $region5
    $region4: #{tpu_custom_call.1} parent=1 // pred_region
      %s20 = ssub.s32 256, 256
      %21 = vsyncadd [#allocation4], %s20
      %s22 = sshll.u32 [#allocation3], 4
      %s23 = int_to_ptr.vmem [resolvable:$true] %s22
      %28 = dma.hbm_to_vmem [thread:$0]  %s0, 256, %s23, [#allocation4], 128, 128, 8
    $region5: #{tpu_custom_call.1} parent=1 // pred_fallthru
      _
    // Predicated region
    $region6: #{tpu_custom_call.1} parent=1 // pred_check
      _
    $region7: #{tpu_custom_call.1} parent=1 // pred_check_branch
      %30 = sbr.rel (0) target = $region9
    $region8: #{tpu_custom_call.1} parent=1 // pred_region
      %s32 = ssub.s32 256, 256
      %33 = vsyncadd [#allocation7], %s32
      %s34 = sshll.u32 [#allocation6], 4
      %s35 = int_to_ptr.vmem [resolvable:$true] %s34
      %40 = dma.hbm_to_vmem [thread:$0]  %s1, 256, %s35, [#allocation7], 128, 128, 8
    $region9: #{tpu_custom_call.1} parent=1 // pred_fallthru
      _
    // Predicated region
    $region10: #{tpu_custom_call.1} parent=1 // pred_check
      _
    $region11: #{tpu_custom_call.1} parent=1 // pred_check_branch
      %42 = sbr.rel (0) target = $region13
    $region12: #{tpu_custom_call.1} parent=1 // pred_region
      _
    $region13: #{tpu_custom_call.1} parent=1 // pred_fallthru
      _
    // Predicated region
    $region14: #{tpu_custom_call.1} parent=1 // pred_check
      _
    $region15: #{tpu_custom_call.1} parent=1 // pred_check_branch
      %44 = sbr.rel (0) target = $region17
    $region16: #{tpu_custom_call.1} parent=1 // pred_region
      _
    $region17: #{tpu_custom_call.1} parent=1 // pred_fallthru
      _
    // Predicated region
    $region18: #{tpu_custom_call.1} parent=1 // pred_check
      _
    $region19: #{tpu_custom_call.1} parent=1 // pred_check_branch
      %46 = sbr.rel (0) target = $region21
    $region20: #{tpu_custom_call.1} parent=1 // pred_region
      %s48 = ssub.s32 1024, 1024
      %49 = vsyncadd [#allocation7], %s48
      %s50 = sshll.u32 [#allocation8], 4
      %s51 = int_to_ptr.vmem [resolvable:$true] %s50
      %56 = dma.hbm_to_vmem [thread:$0]  %s4, 1024, %s51, [#allocation7], 64, 64, 4
    $region21: #{tpu_custom_call.1} parent=1 // pred_fallthru
      _
    // Predicated region
    $region22: #{tpu_custom_call.1} parent=1 // pred_check
      _
    $region23: #{tpu_custom_call.1} parent=1 // pred_check_branch
      %58 = sbr.rel (0) target = $region25
    $region24: #{tpu_custom_call.1} parent=1 // pred_region
      _
    $region25: #{tpu_custom_call.1} parent=1 // pred_fallthru
      _
    // Predicated region
    $region26: #{tpu_custom_call.1} parent=1 // pred_check
      _
    $region27: #{tpu_custom_call.1} parent=1 // pred_check_branch
      %60 = sbr.rel (0) target = $region29
    $region28: #{tpu_custom_call.1} parent=1 // pred_region
      %61 = dma.done [#allocation4], 256
    $region29: #{tpu_custom_call.1} parent=1 // pred_fallthru
      _
    // Predicated region
    $region30: #{tpu_custom_call.1} parent=1 // pred_check
      _
    $region31: #{tpu_custom_call.1} parent=1 // pred_check_branch
      %63 = sbr.rel (0) target = $region33
    $region32: #{tpu_custom_call.1} parent=1 // pred_region
      %64 = dma.done [#allocation7], 256
    $region33: #{tpu_custom_call.1} parent=1 // pred_fallthru
      _
    // Predicated region
    $region34: #{tpu_custom_call.1} parent=1 // pred_check
      _
    $region35: #{tpu_custom_call.1} parent=1 // pred_check_branch
      %66 = sbr.rel (0) target = $region37
    $region36: #{tpu_custom_call.1} parent=1 // pred_region
      %67 = dma.done [#allocation7], 1024
    $region37: #{tpu_custom_call.1} parent=1 // pred_fallthru
      _
    %p69 = scmp.eq.s32.totalorder 0, 0
    // Predicated region
    $region38: #{tpu_custom_call.1} parent=1 // pred_check
      %p70 = pneg %p69
    $region39: #{tpu_custom_call.1} parent=1 // pred_check_branch
      %72 = sbr.rel (%p70) target = $region41
    $region40: #{tpu_custom_call.1} parent=1 // pred_region
      %v73 = vld [vmem:[#allocation6] sm:$0xff]
      %v74 = vld [vmem:[#allocation6 + $0x8] sm:$0xff]
      %v75 = vld [vmem:[#allocation3] sm:$0xff]
      %v76 = vld [vmem:[#allocation3 + $0x8] sm:$0xff]
      %v77 = vadd.f32 %v73, %v75
      %v78 = vadd.f32 %v74, %v76
      %79 = vst [vmem:[#allocation10] sm:$0xff] %v77
      %80 = vst [vmem:[#allocation10 + $0x8] sm:$0xff] %v78
      %v81 = vlaneseq
      %v82 = vand.u32 %v81, 127
      %vm83 = vcmp.lt.s32.totalorder %v82, 32
      %v84 = vsel %vm83, %v77, 0.0
      %v85 = vsel %vm83, %v78, 0.0
      %86 = vadd.xlane.f32.xlu0 %v84
      %v87 = vpop.xlane.xlu0 %86
      %88 = vadd.xlane.f32.xlu0 %v85
      %v89 = vpop.xlane.xlu0 %88
      %v90 = vmul.f32 %v87, 0.03125
      %v91 = vmul.f32 %v89, 0.03125
      %v92 = vsub.f32 %v77, %v90
      %v93 = vsub.f32 %v78, %v91
      %v94 = vsel %vm83, %v92, 0.0
      %v95 = vsel %vm83, %v93, 0.0
      %v96 = vmul.f32 %v94, %v94
      %v97 = vmul.f32 %v95, %v95
      %98 = vadd.xlane.f32.xlu0 %v96
      %v99 = vpop.xlane.xlu0 %98
      %100 = vadd.xlane.f32.xlu0 %v97
      %v101 = vpop.xlane.xlu0 %100
      %v102 = vmul.f32 %v99, 0.03125
      %v103 = vmul.f32 %v101, 0.03125
      %v104 = vadd.f32 %v102, 1e-05
      %v105 = vadd.f32 %v103, 1e-05
      %v106 = vrsqrt.pop %v104
      %v107 = vrsqrt.pop %v105
      %v108 = vmul.f32 %v94, %v106
      %v109 = vmul.f32 %v95, %v107
      %v110 = vld [vmem:[%s2] sm:$0x1]
      %v112 = vlaneseq
      %v113 = vshrl.u32 %v112, 7
      %v114 = vsub.s32 0, %v113
      %v115 = vrot.slane %v110, %v114
      %v117 = vmul.f32 %v108, %v115
      %v118 = vmul.f32 %v109, %v115
      %v119 = vld [vmem:[%s3] sm:$0x1]
      %v121 = vlaneseq
      %v122 = vshrl.u32 %v121, 7
      %v123 = vsub.s32 0, %v122
      %v124 = vrot.slane %v119, %v123
      %v126 = vadd.f32 %v117, %v124
      %v127 = vadd.f32 %v118, %v124
      %v128 = vpack.c.bf16 %v127, %v126
      %129 = vst [vmem:[#allocation2] sm:$0xff] %v128
    $region41: #{tpu_custom_call.1} parent=1 // pred_fallthru
      _
    %v130 = vld [vmem:[#allocation2] sm:$0xff]
    %v131 = vld [vmem:[#allocation8] sm:$0xf]
    %v132 = vld [vmem:[#allocation8 + $0x4] sm:$0xf]
    %v133 = vld [vmem:[#allocation8 + $0x8] sm:$0xf]
    %v134 = vld [vmem:[#allocation8 + $0xc] sm:$0xf]
    %v135 = vld [vmem:[#allocation8 + $0x10] sm:$0xf]
    %v136 = vld [vmem:[#allocation8 + $0x14] sm:$0xf]
    %v137 = vld [vmem:[#allocation8 + $0x18] sm:$0xf]
    %v138 = vld [vmem:[#allocation8 + $0x1c] sm:$0xf]
    %v139 = vld [vmem:[#allocation8 + $0x20] sm:$0xf]
    %v140 = vld [vmem:[#allocation8 + $0x24] sm:$0xf]
    %v141 = vld [vmem:[#allocation8 + $0x28] sm:$0xf]
    %v142 = vld [vmem:[#allocation8 + $0x2c] sm:$0xf]
    %v143 = vld [vmem:[#allocation8 + $0x30] sm:$0xf]
    %v144 = vld [vmem:[#allocation8 + $0x34] sm:$0xf]
    %v145 = vld [vmem:[#allocation8 + $0x38] sm:$0xf]
    %v146 = vld [vmem:[#allocation8 + $0x3c] sm:$0xf]
    %v147 = vld [vmem:[%s5] sm:$0x1]
    %v149 = vlaneseq
    %v150 = vshrl.u32 %v149, 7
    %v151 = vsub.s32 0, %v150
    %v152 = vrot.slane %v147, %v151
    %v170 = vunpack.c.l.b16 %v131
    %v171 = vunpack.c.l.b16 %v132
    %v172 = vunpack.c.l.b16 %v133
    %v173 = vunpack.c.l.b16 %v134
    %v174 = vunpack.c.l.b16 %v135
    %v175 = vunpack.c.l.b16 %v136
    %v176 = vunpack.c.l.b16 %v137
    %v177 = vunpack.c.l.b16 %v138
    %v178 = vunpack.c.l.b16 %v139
    %v179 = vunpack.c.l.b16 %v140
    %v180 = vunpack.c.l.b16 %v141
    %v181 = vunpack.c.l.b16 %v142
    %v182 = vunpack.c.l.b16 %v143
    %v183 = vunpack.c.l.b16 %v144
    %v184 = vunpack.c.l.b16 %v145
    %v185 = vunpack.c.l.b16 %v146
    %v186 = vpack.c.b16 %v171, %v170
    %v187 = vpack.c.b16 %v173, %v172
    %v188 = vpack.c.b16 %v175, %v174
    %v189 = vpack.c.b16 %v177, %v176
    %v190 = vpack.c.b16 %v179, %v178
    %v191 = vpack.c.b16 %v181, %v180
    %v192 = vpack.c.b16 %v183, %v182
    %v193 = vpack.c.b16 %v185, %v184
    %202 = vmatprep.subr.bf16.mxu0 0
    %203 = vmatpush1.bf16.msra.mxu0 %v186
    %204 = vmatprep.subr.bf16.mxu0 0
    %205 = vmatpush1.bf16.msra.mxu0 %v187
    %206 = vmatprep.subr.bf16.mxu0 0
    %207 = vmatpush1.bf16.msra.mxu0 %v188
    %208 = vmatprep.subr.bf16.mxu0 0
    %209 = vmatpush1.bf16.msra.mxu0 %v189
    %210 = vmatprep.subr.bf16.mxu0 0
    %211 = vmatpush1.bf16.msra.mxu0 %v190
    %212 = vmatprep.subr.bf16.mxu0 0
    %213 = vmatpush1.bf16.msra.mxu0 %v191
    %214 = vmatprep.subr.bf16.mxu0 0
    %215 = vmatpush1.bf16.msra.mxu0 %v192
    %216 = vmatprep.subr.bf16.mxu0 0
    %217 = vmatpush1.bf16.msra.mxu0 %v193
    %218 = vmatprep.subr.bf16.mxu0 0
    %219 = vmatpush1.bf16.msra.mxu0 0
    %220 = vmatprep.subr.bf16.mxu0 0
    %221 = vmatpush1.bf16.msra.mxu0 0
    %222 = vmatprep.subr.bf16.mxu0 0
    %223 = vmatpush1.bf16.msra.mxu0 0
    %224 = vmatprep.subr.bf16.mxu0 0
    %225 = vmatpush1.bf16.msra.mxu0 0
    %226 = vmatprep.subr.bf16.mxu0 0
    %227 = vmatpush1.bf16.msra.mxu0 0
    %228 = vmatprep.subr.bf16.mxu0 0
    %229 = vmatpush1.bf16.msra.mxu0 0
    %230 = vmatprep.subr.bf16.mxu0 0
    %231 = vmatpush1.bf16.msra.mxu0 0
    %232 = vmatprep.subr.bf16.mxu0 0
    %233 = vmatpush1.bf16.msra.mxu0 0
    %234 = vmatprep.mubr.bf16.mxu0 0
    %235 = vmatmul.mubr.bf16.gmra.mrb[0].mxu0 %v130
    %v236 = vpop.f32.mrb[0].mxu0
    %v237 = vadd.f32 %v152, %v236
    %v238 = vpop.f32.mrb[0].mxu0
    %v239 = vpop.f32.mrb[0].mxu0
    %v240 = vadd.f32 %v152, %v239
    %v241 = vpop.f32.mrb[0].mxu0
    %242 = vdwg.mxu0
    %243 = vst [vmem:[#allocation9] sm:$0xff] %v237
    %244 = vst [vmem:[#allocation9 + $0x8] sm:$0xff] %v240
    // Predicated region
    $region42: #{tpu_custom_call.1} parent=1 // pred_check
      _
    $region43: #{tpu_custom_call.1} parent=1 // pred_check_branch
      %246 = sbr.rel (0) target = $region45
    $region44: #{tpu_custom_call.1} parent=1 // pred_region
      %s248 = ssub.s32 256, 256
      %249 = vsyncadd [#allocation5], %s248
      %s250 = sshll.u32 [#allocation9], 4
      %s251 = int_to_ptr.vmem [resolvable:$true] %s250
      %256 = dma.vmem_to_hbm [thread:$0]  %s251, 256, %s6, [#allocation5], 128, 128, 8
    $region45: #{tpu_custom_call.1} parent=1 // pred_fallthru
      _
    // Predicated region
    $region46: #{tpu_custom_call.1} parent=1 // pred_check
      _
    $region47: #{tpu_custom_call.1} parent=1 // pred_check_branch
      %258 = sbr.rel (0) target = $region49
    $region48: #{tpu_custom_call.1} parent=1 // pred_region
      %s260 = ssub.s32 256, 256
      %261 = vsyncadd [#allocation11], %s260
      %s262 = sshll.u32 [#allocation10], 4
      %s263 = int_to_ptr.vmem [resolvable:$true] %s262
      %268 = dma.vmem_to_hbm [thread:$0]  %s263, 256, %s7, [#allocation11], 128, 128, 8
    $region49: #{tpu_custom_call.1} parent=1 // pred_fallthru
      _
    // Predicated region
    $region50: #{tpu_custom_call.1} parent=1 // pred_check
      _
    $region51: #{tpu_custom_call.1} parent=1 // pred_check_branch
      %270 = sbr.rel (0) target = $region53
    $region52: #{tpu_custom_call.1} parent=1 // pred_region
      %271 = dma.done [#allocation5], 256
    $region53: #{tpu_custom_call.1} parent=1 // pred_fallthru
      _
    // Predicated region
    $region54: #{tpu_custom_call.1} parent=1 // pred_check
      _
    $region55: #{tpu_custom_call.1} parent=1 // pred_check_branch
      %273 = sbr.rel (0) target = $region57
    $region56: #{tpu_custom_call.1} parent=1 // pred_region
      %274 = dma.done [#allocation11], 256
    $region57: #{tpu_custom_call.1} parent=1 // pred_fallthru
      _
    %275 = vsyncpa [#allocation4], 1
    %276 = vsyncpa [#allocation7], 1
    %277 = vsyncpa [#allocation5], 1
    %278 = vsyncpa [#allocation11], 1

</llo_original>
